<compile_context>
chip_gen: v7x
topology: tpu7x:2x2x1
jax: 0.10.0
libtpu: 0.0.40
codegen_flags: <defaults>
</compile_context>

<pallas_src>
import functools
import math

import jax
import jax.numpy as jnp
from jax.experimental import pallas as pl
from jax.experimental.pallas import tpu as pltpu


def _safe_tanh(v, clamp=15.0):
    return jnp.tanh(jnp.clip(v, -clamp, clamp))


def _artanh(v):
    v = jnp.clip(v, -1.0 + 1e-5, 1.0 - 1e-5)
    return 0.5 * (jnp.log(1.0 + v) - jnp.log(1.0 - v))


def hyplinear_kernel(x_ref, wt_ref, bh_ref, o_ref, *, c, has_bias):
    sqrt_c = c ** 0.5
    maxnorm = (1.0 - 1e-3) / sqrt_c

    x = x_ref[...]                      # (TB, IN)  native dtype -> MXU fast path
    wt = wt_ref[...]                    # (IN, OUT) pre-transposed in the wrapper

    # ---- mobius_matvec(weight, x, c) ---------------------------------------
    mx = jnp.dot(x, wt, preferred_element_type=jnp.float32)         # (TB, OUT)

    xf = x.astype(jnp.float32)
    x_norm = jnp.maximum(
        jnp.sqrt(jnp.sum(xf * xf, axis=-1, keepdims=True)), 1e-5)   # (TB, 1)
    mx_norm = jnp.sqrt(jnp.sum(mx * mx, axis=-1, keepdims=True))    # (TB, 1)

    # Per-row scale: tanh(|Mx|/|x| * artanh(sqrt_c |x|)) / (sqrt_c |Mx|).
    # Floor the divisor so a ~0 row never produces inf before the mask.
    t = _safe_tanh(mx_norm / x_norm * _artanh(sqrt_c * x_norm))     # (TB, 1)
    inv_mx = 1.0 / (jnp.maximum(mx_norm, 1e-30) * sqrt_c)           # (TB, 1)
    scale = jnp.where(mx_norm == 0.0, 0.0, t * inv_mx)              # (TB, 1)
    res = mx * scale                                                # (TB, OUT)

    # project(res): ||res|| == scale * mx_norm (scale >= 0), so no extra
    # cross-lane reduction is needed for the projection.
    res_norm = jnp.maximum(scale * mx_norm, 1e-5)                   # (TB, 1)
    proj = jnp.where(res_norm > maxnorm, maxnorm / res_norm, 1.0)
    mv = res * proj                                                 # (TB, OUT)
    mv_norm = jnp.minimum(res_norm, maxnorm)                        # (TB, 1)

    if not has_bias:
        o_ref[...] = mv.astype(o_ref.dtype)
        return

    bias_h = bh_ref[...].astype(jnp.float32)     # (1, OUT) = expmap0(bias, c)

    # ---- mobius_add(mv, bias_h) ---------------------------------------------
    x2 = mv_norm * mv_norm                                          # (TB, 1)
    y2 = jnp.sum(bias_h * bias_h, axis=-1, keepdims=True)           # (1, 1)
    xy = jnp.sum(mv * bias_h, axis=-1, keepdims=True)               # (TB, 1)
    num = (1.0 + 2.0 * c * xy + c * y2) * mv + (1.0 - c * x2) * bias_h
    denom = 1.0 + 2.0 * c * xy + (c * c) * x2 * y2                  # (TB, 1)
    added = num * (1.0 / (denom + 1e-5))                            # (TB, OUT)

    # ---- final project -------------------------------------------------------
    a_norm = jnp.maximum(
        jnp.sqrt(jnp.sum(added * added, axis=-1, keepdims=True)), 1e-5)
    proj2 = jnp.where(a_norm > maxnorm, maxnorm / a_norm, 1.0)
    o_ref[...] = (added * proj2).astype(o_ref.dtype)


def _round_up(a, m):
    return (a + m - 1) // m * m


def _expmap0_jax(u, c):
    sqrt_c = c ** 0.5
    u_norm = jnp.maximum(jnp.linalg.norm(u, axis=-1, keepdims=True), 1e-5)
    return _safe_tanh(sqrt_c * u_norm) * u / (sqrt_c * u_norm)


def hyp_linear(x, weight, bias, c, *, tile_b=256):
    """HypLinear forward. x:[B,IN], weight:[OUT,IN] (PyTorch layout), bias:[OUT]|None."""
    B, IN = x.shape
    OUT, IN_w = weight.shape
    assert IN_w == IN
    c = float(c)

    # Lane-pad feature dims to 128, sublane/tile-pad the batch.
    # Zero padding is inert for every norm & dot used here; sliced off at the end.
    IN_p = _round_up(IN, 128)
    OUT_p = _round_up(OUT, 128)
    tile_b = max(8, _round_up(min(int(tile_b), B), 8))
    B_p = _round_up(B, tile_b)

    x_p = jnp.pad(x, ((0, B_p - B), (0, IN_p - IN)))
    # Transpose once in HBM so the kernel never pays a per-step relayout.
    wt_p = jnp.pad(weight, ((0, OUT_p - OUT), (0, IN_p - IN))).T.astype(x.dtype)

    has_bias = bias is not None
    if has_bias:
        # expmap0(bias) is constant across the batch/grid -> hoist out of kernel.
        bias_h = _expmap0_jax(bias.astype(jnp.float32).reshape(1, OUT), c)
    else:
        bias_h = jnp.zeros((1, OUT), jnp.float32)
    bias_h_p = jnp.pad(bias_h, ((0, 0), (0, OUT_p - OUT)))

    kernel = functools.partial(hyplinear_kernel, c=c, has_bias=has_bias)
    out_p = pl.pallas_call(
        kernel,
        out_shape=jax.ShapeDtypeStruct((B_p, OUT_p), x.dtype),
        grid_spec=pltpu.PrefetchScalarGridSpec(
            num_scalar_prefetch=0,
            grid=(B_p // tile_b,),
            in_specs=[
                pl.BlockSpec((tile_b, IN_p), lambda i: (i, 0)),
                # Weight / bias blocks are grid-invariant (constant index_map),
                # so they are DMA'd once and stay resident in VMEM.
                # TODO(synk): for very large weights on v7x (64 MiB VMEM), use
                # pipeline_mode=pl.Buffered(1) + a K-tiled inner accumulation.
                pl.BlockSpec((IN_p, OUT_p), lambda i: (0, 0)),
                pl.BlockSpec((1, OUT_p), lambda i: (0, 0)),
            ],
            out_specs=pl.BlockSpec((tile_b, OUT_p), lambda i: (i, 0)),
        ),
        compiler_params=pltpu.CompilerParams(
            dimension_semantics=("parallel",),
            # Unlock large batch tiles (default scoped VMEM is only 16/32 MiB).
            vmem_limit_bytes=64 * 1024 * 1024,
        ),
    )(x_p, wt_p, bias_h_p)

    return out_p[:B, :OUT]


def hyp_linear_ref(x, weight, bias, c):
    """Pure-JAX mirror of the PyTorch forward (for validation)."""
    c = jnp.float32(c)
    sqrt_c = jnp.sqrt(c)

    def proj(v):
        n = jnp.maximum(jnp.linalg.norm(v, axis=-1, keepdims=True), 1e-5)
        mn = (1.0 - 1e-3) / sqrt_c
        return jnp.where(n > mn, v / n * mn, v)

    x_norm = jnp.maximum(jnp.linalg.norm(x, axis=-1, keepdims=True), 1e-5)
    mx = x @ weight.T
    mx_norm = jnp.linalg.norm(mx, axis=-1, keepdims=True)
    res_c = (_safe_tanh(mx_norm / x_norm * _artanh(sqrt_c * x_norm))
             * mx / (mx_norm * sqrt_c))
    res = jnp.where(jnp.all(mx == 0, axis=-1, keepdims=True), 0.0, res_c)
    mv = proj(res)
    if bias is None:
        return mv

    b_norm = jnp.maximum(jnp.linalg.norm(bias, axis=-1, keepdims=True), 1e-5)
    bh = _safe_tanh(sqrt_c * b_norm) * bias / (sqrt_c * b_norm)

    x2 = jnp.sum(mv * mv, -1, keepdims=True)
    y2 = jnp.sum(bh * bh, -1, keepdims=True)
    xy = jnp.sum(mv * bh, -1, keepdims=True)
    num = (1 + 2 * c * xy + c * y2) * mv + (1 - c * x2) * bh
    den = 1 + 2 * c * xy + c * c * x2 * y2
    return proj(num / (den + 1e-5))


if __name__ == "__main__":
    B, IN, OUT = 16, 32, 32
    C = 1.0

    key = jax.random.PRNGKey(0)
    kx, kw, kb = jax.random.split(key, 3)

    # kaiming_uniform_(a=sqrt(5)) on (OUT, IN)  ->  U(-1/sqrt(IN), 1/sqrt(IN))
    bound = 1.0 / math.sqrt(IN)
    weight = jax.random.uniform(kw, (OUT, IN), jnp.float32, -bound, bound)
    bias = jax.random.uniform(kb, (OUT,), jnp.float32, -bound, bound)

    # small-norm inputs so they live comfortably inside the Poincare ball
    x = 0.1 * jax.random.normal(kx, (B, IN), jnp.float32)

    out = hyp_linear(x, weight, bias, C)
    out = jax.block_until_ready(out)

    ref = hyp_linear_ref(x, weight, bias, C)
    assert out.shape == (B, OUT)
    assert jnp.allclose(out, ref, atol=1e-5, rtol=1e-5), float(
        jnp.max(jnp.abs(out - ref)))

    print("KERNEL_OK")
</pallas_src>

<mosaic_0001>
module attributes {stable_mosaic.version = 11 : i64} {
  func.func @hyplinear_kernel(%arg0: i32, %arg1: memref<16x128xf32, #tpu.memory_space<vmem>>, %arg2: memref<128x128xf32, #tpu.memory_space<vmem>>, %arg3: memref<1x128xf32, #tpu.memory_space<vmem>>, %arg4: memref<16x128xf32, #tpu.memory_space<vmem>>) attributes {dimension_semantics = [#tpu.dimension_semantics<parallel>], iteration_bounds = array<i64: 1>, scalar_prefetch = 0 : i64, scratch_operands = 0 : i64, tpu.core_type = #tpu.core_type<tc>, window_params = [{transform_indices = @transform_0, window_bounds = array<i64: 16, 128>}, {pipeline_mode = #tpu.pipeline_mode<synchronous>, transform_indices = @transform_1, window_bounds = array<i64: 128, 128>}, {pipeline_mode = #tpu.pipeline_mode<synchronous>, transform_indices = @transform_2, window_bounds = array<i64: 1, 128>}, {transform_indices = @transform_3, window_bounds = array<i64: 16, 128>}]} {
    %c0 = arith.constant 0 : index
    %c0_0 = arith.constant 0 : index
    %0 = vector.load %arg1[%c0, %c0_0] : memref<16x128xf32, #tpu.memory_space<vmem>>, vector<16x128xf32>
    %c0_1 = arith.constant 0 : index
    %c0_2 = arith.constant 0 : index
    %1 = vector.load %arg2[%c0_1, %c0_2] : memref<128x128xf32, #tpu.memory_space<vmem>>, vector<128x128xf32>
    %cst = arith.constant dense<0.000000e+00> : vector<16x128xf32>
    %2 = tpu.matmul %0, %1, %cst {dimension_numbers = #tpu.dot_dimension_numbers<[1], [0], [0], [1], [0, 0, 1, 1], [], []>} : vector<16x128xf32>, vector<128x128xf32>, vector<16x128xf32> -> vector<16x128xf32>
    %3 = arith.mulf %0, %0 : vector<16x128xf32>
    %cst_3 = arith.constant dense<0.000000e+00> : vector<16xf32>
    %4 = vector.multi_reduction <add>, %3, %cst_3 [1] : vector<16x128xf32> to vector<16xf32>
    %5 = vector.shape_cast %4 : vector<16xf32> to vector<16x1xf32>
    %6 = math.sqrt %5 : vector<16x1xf32>
    %cst_4 = arith.constant 9.99999974E-6 : f32
    %7 = vector.broadcast %cst_4 : f32 to vector<16x1xf32>
    %8 = arith.maximumf %6, %7 : vector<16x1xf32>
    %9 = arith.mulf %2, %2 : vector<16x128xf32>
    %cst_5 = arith.constant dense<0.000000e+00> : vector<16xf32>
    %10 = vector.multi_reduction <add>, %9, %cst_5 [1] : vector<16x128xf32> to vector<16xf32>
    %11 = vector.shape_cast %10 : vector<16xf32> to vector<16x1xf32>
    %12 = math.sqrt %11 : vector<16x1xf32>
    %13 = arith.divf %12, %8 : vector<16x1xf32>
    %cst_6 = arith.constant 1.000000e+00 : f32
    %14 = vector.broadcast %cst_6 : f32 to vector<16x1xf32>
    %15 = arith.mulf %14, %8 : vector<16x1xf32>
    %cst_7 = arith.constant -0.999989986 : f32
    %cst_8 = arith.constant 0.999989986 : f32
    %16 = vector.broadcast %cst_7 : f32 to vector<16x1xf32>
    %17 = arith.maximumf %16, %15 : vector<16x1xf32>
    %18 = vector.broadcast %cst_8 : f32 to vector<16x1xf32>
    %19 = arith.minimumf %18, %17 : vector<16x1xf32>
    %cst_9 = arith.constant 1.000000e+00 : f32
    %20 = vector.broadcast %cst_9 : f32 to vector<16x1xf32>
    %21 = arith.addf %20, %19 : vector<16x1xf32>
    %22 = math.log %21 : vector<16x1xf32>
    %cst_10 = arith.constant 1.000000e+00 : f32
    %23 = vector.broadcast %cst_10 : f32 to vector<16x1xf32>
    %24 = arith.subf %23, %19 : vector<16x1xf32>
    %25 = math.log %24 : vector<16x1xf32>
    %26 = arith.subf %22, %25 : vector<16x1xf32>
    %cst_11 = arith.constant 5.000000e-01 : f32
    %27 = vector.broadcast %cst_11 : f32 to vector<16x1xf32>
    %28 = arith.mulf %27, %26 : vector<16x1xf32>
    %29 = arith.mulf %13, %28 : vector<16x1xf32>
    %cst_12 = arith.constant -1.500000e+01 : f32
    %cst_13 = arith.constant 1.500000e+01 : f32
    %30 = vector.broadcast %cst_12 : f32 to vector<16x1xf32>
    %31 = arith.maximumf %30, %29 : vector<16x1xf32>
    %32 = vector.broadcast %cst_13 : f32 to vector<16x1xf32>
    %33 = arith.minimumf %32, %31 : vector<16x1xf32>
    %34 = math.tanh %33 : vector<16x1xf32>
    %cst_14 = arith.constant 1.000000e-30 : f32
    %35 = vector.broadcast %cst_14 : f32 to vector<16x1xf32>
    %36 = arith.maximumf %12, %35 : vector<16x1xf32>
    %cst_15 = arith.constant 1.000000e+00 : f32
    %37 = vector.broadcast %cst_15 : f32 to vector<16x1xf32>
    %38 = arith.mulf %36, %37 : vector<16x1xf32>
    %cst_16 = arith.constant 1.000000e+00 : f32
    %39 = vector.broadcast %cst_16 : f32 to vector<16x1xf32>
    %40 = arith.divf %39, %38 : vector<16x1xf32>
    %cst_17 = arith.constant 0.000000e+00 : f32
    %41 = vector.broadcast %cst_17 : f32 to vector<16x1xf32>
    %42 = arith.cmpf oeq, %12, %41 : vector<16x1xf32>
    %43 = arith.mulf %34, %40 : vector<16x1xf32>
    %cst_18 = arith.constant 0.000000e+00 : f32
    %44 = vector.broadcast %cst_18 : f32 to vector<16x1xf32>
    %45 = arith.select %42, %44, %43 : vector<16x1xi1>, vector<16x1xf32>
    %46 = vector.broadcast %45 : vector<16x1xf32> to vector<16x128xf32>
    %47 = arith.mulf %2, %46 : vector<16x128xf32>
    %48 = arith.mulf %45, %12 : vector<16x1xf32>
    %cst_19 = arith.constant 9.99999974E-6 : f32
    %49 = vector.broadcast %cst_19 : f32 to vector<16x1xf32>
    %50 = arith.maximumf %48, %49 : vector<16x1xf32>
    %cst_20 = arith.constant 9.990000e-01 : f32
    %51 = vector.broadcast %cst_20 : f32 to vector<16x1xf32>
    %52 = arith.cmpf ogt, %50, %51 : vector<16x1xf32>
    %cst_21 = arith.constant 9.990000e-01 : f32
    %53 = vector.broadcast %cst_21 : f32 to vector<16x1xf32>
    %54 = arith.divf %53, %50 : vector<16x1xf32>
    %cst_22 = arith.constant 1.000000e+00 : f32
    %55 = vector.broadcast %cst_22 : f32 to vector<16x1xf32>
    %56 = arith.select %52, %54, %55 : vector<16x1xi1>, vector<16x1xf32>
    %57 = vector.broadcast %56 : vector<16x1xf32> to vector<16x128xf32>
    %58 = arith.mulf %47, %57 : vector<16x128xf32>
    %cst_23 = arith.constant 9.990000e-01 : f32
    %59 = vector.broadcast %cst_23 : f32 to vector<16x1xf32>
    %60 = arith.minimumf %50, %59 : vector<16x1xf32>
    %c0_24 = arith.constant 0 : index
    %c0_25 = arith.constant 0 : index
    %61 = vector.load %arg3[%c0_24, %c0_25] : memref<1x128xf32, #tpu.memory_space<vmem>>, vector<1x128xf32>
    %62 = arith.mulf %60, %60 : vector<16x1xf32>
    %63 = arith.mulf %61, %61 : vector<1x128xf32>
    %cst_26 = arith.constant dense<0.000000e+00> : vector<1xf32>
    %64 = vector.multi_reduction <add>, %63, %cst_26 [1] : vector<1x128xf32> to vector<1xf32>
    %65 = vector.shape_cast %64 : vector<1xf32> to vector<1x1xf32>
    %66 = vector.broadcast %61 : vector<1x128xf32> to vector<16x128xf32>
    %67 = arith.mulf %58, %66 : vector<16x128xf32>
    %cst_27 = arith.constant dense<0.000000e+00> : vector<16xf32>
    %68 = vector.multi_reduction <add>, %67, %cst_27 [1] : vector<16x128xf32> to vector<16xf32>
    %69 = vector.shape_cast %68 : vector<16xf32> to vector<16x1xf32>
    %cst_28 = arith.constant 2.000000e+00 : f32
    %70 = vector.broadcast %cst_28 : f32 to vector<16x1xf32>
    %71 = arith.mulf %70, %69 : vector<16x1xf32>
    %cst_29 = arith.constant 1.000000e+00 : f32
    %72 = vector.broadcast %cst_29 : f32 to vector<16x1xf32>
    %73 = arith.addf %72, %71 : vector<16x1xf32>
    %cst_30 = arith.constant 1.000000e+00 : f32
    %74 = vector.broadcast %cst_30 : f32 to vector<1x1xf32>
    %75 = arith.mulf %74, %65 : vector<1x1xf32>
    %76 = vector.broadcast %75 : vector<1x1xf32> to vector<16x1xf32>
    %77 = arith.addf %73, %76 : vector<16x1xf32>
    %78 = vector.broadcast %77 : vector<16x1xf32> to vector<16x128xf32>
    %79 = arith.mulf %78, %58 : vector<16x128xf32>
    %cst_31 = arith.constant 1.000000e+00 : f32
    %80 = vector.broadcast %cst_31 : f32 to vector<16x1xf32>
    %81 = arith.mulf %80, %62 : vector<16x1xf32>
    %cst_32 = arith.constant 1.000000e+00 : f32
    %82 = vector.broadcast %cst_32 : f32 to vector<16x1xf32>
    %83 = arith.subf %82, %81 : vector<16x1xf32>
    %84 = vector.broadcast %83 : vector<16x1xf32> to vector<16x128xf32>
    %85 = vector.broadcast %61 : vector<1x128xf32> to vector<16x128xf32>
    %86 = arith.mulf %84, %85 : vector<16x128xf32>
    %87 = arith.addf %79, %86 : vector<16x128xf32>
    %cst_33 = arith.constant 2.000000e+00 : f32
    %88 = vector.broadcast %cst_33 : f32 to vector<16x1xf32>
    %89 = arith.mulf %88, %69 : vector<16x1xf32>
    %cst_34 = arith.constant 1.000000e+00 : f32
    %90 = vector.broadcast %cst_34 : f32 to vector<16x1xf32>
    %91 = arith.addf %90, %89 : vector<16x1xf32>
    %cst_35 = arith.constant 1.000000e+00 : f32
    %92 = vector.broadcast %cst_35 : f32 to vector<16x1xf32>
    %93 = arith.mulf %92, %62 : vector<16x1xf32>
    %94 = vector.broadcast %65 : vector<1x1xf32> to vector<16x1xf32>
    %95 = arith.mulf %93, %94 : vector<16x1xf32>
    %96 = arith.addf %91, %95 : vector<16x1xf32>
    %cst_36 = arith.constant 9.99999974E-6 : f32
    %97 = vector.broadcast %cst_36 : f32 to vector<16x1xf32>
    %98 = arith.addf %96, %97 : vector<16x1xf32>
    %cst_37 = arith.constant 1.000000e+00 : f32
    %99 = vector.broadcast %cst_37 : f32 to vector<16x1xf32>
    %100 = arith.divf %99, %98 : vector<16x1xf32>
    %101 = vector.broadcast %100 : vector<16x1xf32> to vector<16x128xf32>
    %102 = arith.mulf %87, %101 : vector<16x128xf32>
    %103 = arith.mulf %102, %102 : vector<16x128xf32>
    %cst_38 = arith.constant dense<0.000000e+00> : vector<16xf32>
    %104 = vector.multi_reduction <add>, %103, %cst_38 [1] : vector<16x128xf32> to vector<16xf32>
    %105 = vector.shape_cast %104 : vector<16xf32> to vector<16x1xf32>
    %106 = math.sqrt %105 : vector<16x1xf32>
    %cst_39 = arith.constant 9.99999974E-6 : f32
    %107 = vector.broadcast %cst_39 : f32 to vector<16x1xf32>
    %108 = arith.maximumf %106, %107 : vector<16x1xf32>
    %cst_40 = arith.constant 9.990000e-01 : f32
    %109 = vector.broadcast %cst_40 : f32 to vector<16x1xf32>
    %110 = arith.cmpf ogt, %108, %109 : vector<16x1xf32>
    %cst_41 = arith.constant 9.990000e-01 : f32
    %111 = vector.broadcast %cst_41 : f32 to vector<16x1xf32>
    %112 = arith.divf %111, %108 : vector<16x1xf32>
    %cst_42 = arith.constant 1.000000e+00 : f32
    %113 = vector.broadcast %cst_42 : f32 to vector<16x1xf32>
    %114 = arith.select %110, %112, %113 : vector<16x1xi1>, vector<16x1xf32>
    %115 = vector.broadcast %114 : vector<16x1xf32> to vector<16x128xf32>
    %116 = arith.mulf %102, %115 : vector<16x128xf32>
    %c0_43 = arith.constant 0 : index
    %c0_44 = arith.constant 0 : index
    %117 = vector.load %arg4[%c0_43, %c0_44] : memref<16x128xf32, #tpu.memory_space<vmem>>, vector<16x128xf32>
    tpu.vector_store %arg4[%c0_43, %c0_44], %116 {strides = array<i32>} : memref<16x128xf32, #tpu.memory_space<vmem>>, vector<16x128xf32>,
    return
  }
  func.func @transform_0(%arg0: i32) -> (i32, i32) {
    %c0_i32 = arith.constant 0 : i32
    %c0_i32_0 = arith.constant 0 : i32
    return %arg0, %c0_i32 : i32, i32
  }
  func.func @transform_1(%arg0: i32) -> (i32, i32) {
    %c0_i32 = arith.constant 0 : i32
    %c0_i32_0 = arith.constant 0 : i32
    %c0_i32_1 = arith.constant 0 : i32
    return %c0_i32, %c0_i32_0 : i32, i32
  }
  func.func @transform_2(%arg0: i32) -> (i32, i32) {
    %c0_i32 = arith.constant 0 : i32
    %c0_i32_0 = arith.constant 0 : i32
    %c0_i32_1 = arith.constant 0 : i32
    return %c0_i32, %c0_i32_0 : i32, i32
  }
  func.func @transform_3(%arg0: i32) -> (i32, i32) {
    %c0_i32 = arith.constant 0 : i32
    %c0_i32_0 = arith.constant 0 : i32
    return %arg0, %c0_i32 : i32, i32
  }
}

</mosaic_0001>

<llo_original>
// kernel: tpu_custom_call.1
$region0: #{tpu_custom_call.1}
  #allocation0 [shape = 'u32[]', space=smem, size = 0x4, offset = 0x4, fixed_abs, tag = 'smem constant byte address 0x4 - core index']
  #allocation1 [shape = 'u32[144,128]{1,0:T(1,128)}', space=vmem, size = 0x12000, scoped, tag = 'internal scratch']
  %s0 = inlined_call_operand.hbm [shape: f32[16,128], index: 0, kind: input, shape index: {}]
  %s1 = inlined_call_operand.hbm [shape: f32[128,128], index: 1, kind: input, shape index: {}]
  %s2 = inlined_call_operand.hbm [shape: f32[1,128], index: 2, kind: input, shape index: {}]
  %s3 = inlined_call_operand.hbm [shape: f32[16,128], index: 3, kind: output, shape index: {}]
  %s4 = sld [smem:[#allocation0]]
  $region34: #{tpu_custom_call.1} parent=0
    _
  %s6 = ssub.s32 1, %s4
  %s7 = scalar_select 0, %s6, %s4
  $region1: #{tpu_custom_call.1} parent=0
    #allocation2 [shape = 'u8[8192]{0}', space=vmem, size = 0x2000, scoped, tag = 'input window, operand 0, single buffered']
    #allocation3 [shape = 's32[1]{0}', space=sflag, size = 0x4, scoped, tag = 'scoped memory for tpu_custom_call.1']
    #allocation4 [shape = 's32[1]{0}', space=sflag, size = 0x4, scoped, tag = 'scoped memory for tpu_custom_call.1']
    #allocation5 [shape = 'u8[65536]{0}', space=vmem, size = 0x10000, scoped, tag = 'input window, operand 1, single buffered']
    #allocation6 [shape = 's32[1]{0}', space=sflag, size = 0x4, scoped, tag = 'scoped memory for tpu_custom_call.1']
    #allocation7 [shape = 'u8[512]{0}', space=vmem, size = 0x400, scoped, tag = 'input window, operand 2, single buffered']
    #allocation8 [shape = 'u8[8192]{0}', space=vmem, size = 0x2000, scoped, tag = 'output window, operand 0, single buffered']
    %8 = vsyncpa [#allocation3], 0
    %9 = vsyncpa [#allocation6], 0
    %10 = vsyncpa [#allocation4], 0
    // Predicated region
    $region2: #{tpu_custom_call.1} parent=1 // pred_check
      _
    $region3: #{tpu_custom_call.1} parent=1 // pred_check_branch
      %12 = sbr.rel (0) target = $region5
    $region4: #{tpu_custom_call.1} parent=1 // pred_region
      %s14 = ssub.s32 256, 256
      %15 = vsyncadd [#allocation3], %s14
      %s16 = sshll.u32 [#allocation2], 4
      %s17 = int_to_ptr.vmem [resolvable:$true] %s16
      %22 = dma.hbm_to_vmem [thread:$0]  %s0, 256, %s17, [#allocation3], 128, 128, 8
    $region5: #{tpu_custom_call.1} parent=1 // pred_fallthru
      _
    // Predicated region
    $region6: #{tpu_custom_call.1} parent=1 // pred_check
      _
    $region7: #{tpu_custom_call.1} parent=1 // pred_check_branch
      %24 = sbr.rel (0) target = $region9
    $region8: #{tpu_custom_call.1} parent=1 // pred_region
      %s26 = ssub.s32 2048, 2048
      %27 = vsyncadd [#allocation6], %s26
      %s28 = sshll.u32 [#allocation5], 4
      %s29 = int_to_ptr.vmem [resolvable:$true] %s28
      %34 = dma.hbm_to_vmem [thread:$0]  %s1, 2048, %s29, [#allocation6], 128, 128, 8
    $region9: #{tpu_custom_call.1} parent=1 // pred_fallthru
      _
    // Predicated region
    $region10: #{tpu_custom_call.1} parent=1 // pred_check
      _
    $region11: #{tpu_custom_call.1} parent=1 // pred_check_branch
      %36 = sbr.rel (0) target = $region13
    $region12: #{tpu_custom_call.1} parent=1 // pred_region
      %s38 = ssub.s32 16, 16
      %39 = vsyncadd [#allocation6], %s38
      %s41 = sshll.u32 [#allocation7], 4
      %s42 = int_to_ptr.vmem [resolvable:$true] %s41
      %44 = dma.hbm_to_vmem [thread:$0]  %s2, 16, %s42, [#allocation6]
    $region13: #{tpu_custom_call.1} parent=1 // pred_fallthru
      _
    // Predicated region
    $region14: #{tpu_custom_call.1} parent=1 // pred_check
      _
    $region15: #{tpu_custom_call.1} parent=1 // pred_check_branch
      %46 = sbr.rel (0) target = $region17
    $region16: #{tpu_custom_call.1} parent=1 // pred_region
      %47 = dma.done [#allocation3], 256
    $region17: #{tpu_custom_call.1} parent=1 // pred_fallthru
      _
    // Predicated region
    $region18: #{tpu_custom_call.1} parent=1 // pred_check
      _
    $region19: #{tpu_custom_call.1} parent=1 // pred_check_branch
      %49 = sbr.rel (0) target = $region21
    $region20: #{tpu_custom_call.1} parent=1 // pred_region
      %50 = dma.done [#allocation6], 2048
    $region21: #{tpu_custom_call.1} parent=1 // pred_fallthru
      _
    // Predicated region
    $region22: #{tpu_custom_call.1} parent=1 // pred_check
      _
    $region23: #{tpu_custom_call.1} parent=1 // pred_check_branch
      %52 = sbr.rel (0) target = $region25
    $region24: #{tpu_custom_call.1} parent=1 // pred_region
      %53 = dma.done [#allocation6], 16
    $region25: #{tpu_custom_call.1} parent=1 // pred_fallthru
      _
    %v54 = vld [vmem:[#allocation2] sm:$0xff]
    %v55 = vld [vmem:[#allocation2 + $0x8] sm:$0xff]
    %v56 = vld [vmem:[#allocation5] sm:$0xff]
    %v57 = vld [vmem:[#allocation5 + $0x8] sm:$0xff]
    %v58 = vld [vmem:[#allocation5 + $0x10] sm:$0xff]
    %v59 = vld [vmem:[#allocation5 + $0x18] sm:$0xff]
    %v60 = vld [vmem:[#allocation5 + $0x20] sm:$0xff]
    %v61 = vld [vmem:[#allocation5 + $0x28] sm:$0xff]
    %v62 = vld [vmem:[#allocation5 + $0x30] sm:$0xff]
    %v63 = vld [vmem:[#allocation5 + $0x38] sm:$0xff]
    %v64 = vld [vmem:[#allocation5 + $0x40] sm:$0xff]
    %v65 = vld [vmem:[#allocation5 + $0x48] sm:$0xff]
    %v66 = vld [vmem:[#allocation5 + $0x50] sm:$0xff]
    %v67 = vld [vmem:[#allocation5 + $0x58] sm:$0xff]
    %v68 = vld [vmem:[#allocation5 + $0x60] sm:$0xff]
    %v69 = vld [vmem:[#allocation5 + $0x68] sm:$0xff]
    %v70 = vld [vmem:[#allocation5 + $0x70] sm:$0xff]
    %v71 = vld [vmem:[#allocation5 + $0x78] sm:$0xff]
    %72 = vmatprep.subr.mxu0 0.0
    %73 = vmatpush1.msra.mxu0 %v56
    %74 = vmatprep.subr.mxu0 0.0
    %75 = vmatpush1.msra.mxu0 %v57
    %76 = vmatprep.subr.mxu0 0.0
    %77 = vmatpush1.msra.mxu0 %v58
    %78 = vmatprep.subr.mxu0 0.0
    %79 = vmatpush1.msra.mxu0 %v59
    %80 = vmatprep.subr.mxu0 0.0
    %81 = vmatpush1.msra.mxu0 %v60
    %82 = vmatprep.subr.mxu0 0.0
    %83 = vmatpush1.msra.mxu0 %v61
    %84 = vmatprep.subr.mxu0 0.0
    %85 = vmatpush1.msra.mxu0 %v62
    %86 = vmatprep.subr.mxu0 0.0
    %87 = vmatpush1.msra.mxu0 %v63
    %88 = vmatprep.subr.mxu0 0.0
    %89 = vmatpush1.msra.mxu0 %v64
    %90 = vmatprep.subr.mxu0 0.0
    %91 = vmatpush1.msra.mxu0 %v65
    %92 = vmatprep.subr.mxu0 0.0
    %93 = vmatpush1.msra.mxu0 %v66
    %94 = vmatprep.subr.mxu0 0.0
    %95 = vmatpush1.msra.mxu0 %v67
    %96 = vmatprep.subr.mxu0 0.0
    %97 = vmatpush1.msra.mxu0 %v68
    %98 = vmatprep.subr.mxu0 0.0
    %99 = vmatpush1.msra.mxu0 %v69
    %100 = vmatprep.subr.mxu0 0.0
    %101 = vmatpush1.msra.mxu0 %v70
    %102 = vmatprep.subr.mxu0 0.0
    %103 = vmatpush1.msra.mxu0 %v71
    %104 = vmatprep.subr.mxu0 0.0
    %105 = vmatpush1.msra.mxu0 0.0
    %106 = vmatprep.subr.mxu0 0.0
    %107 = vmatpush1.msra.mxu0 0.0
    %108 = vmatprep.subr.mxu0 0.0
    %109 = vmatpush1.msra.mxu0 0.0
    %110 = vmatprep.subr.mxu0 0.0
    %111 = vmatpush1.msra.mxu0 0.0
    %112 = vmatprep.subr.mxu0 0.0
    %113 = vmatpush1.msra.mxu0 0.0
    %114 = vmatprep.subr.mxu0 0.0
    %115 = vmatpush1.msra.mxu0 0.0
    %116 = vmatprep.subr.mxu0 0.0
    %117 = vmatpush1.msra.mxu0 0.0
    %118 = vmatprep.subr.mxu0 0.0
    %119 = vmatpush1.msra.mxu0 0.0
    %120 = vmatprep.subr.mxu0 0.0
    %121 = vmatpush1.msra.mxu0 0.0
    %122 = vmatprep.subr.mxu0 0.0
    %123 = vmatpush1.msra.mxu0 0.0
    %124 = vmatprep.subr.mxu0 0.0
    %125 = vmatpush1.msra.mxu0 0.0
    %126 = vmatprep.subr.mxu0 0.0
    %127 = vmatpush1.msra.mxu0 0.0
    %128 = vmatprep.subr.mxu0 0.0
    %129 = vmatpush1.msra.mxu0 0.0
    %130 = vmatprep.subr.mxu0 0.0
    %131 = vmatpush1.msra.mxu0 0.0
    %132 = vmatprep.subr.mxu0 0.0
    %133 = vmatpush1.msra.mxu0 0.0
    %134 = vmatprep.subr.mxu0 0.0
    %135 = vmatpush1.msra.mxu0 0.0
    %136 = vmatprep.mubr.f32.mxu0 0.0
    %137 = vmatmul.mubr.f32.gmra.mrb[0].mxu0 %v54
    %v138 = vpop.f32.mrb[0].mxu0
    %v139 = vadd.f32 0.0, %v138
    %v140 = vpop.f32.mrb[0].mxu0
    %141 = vmatprep.mubr.f32.mxu0 0.0
    %142 = vmatmul.mubr.f32.gmra.mrb[0].mxu0 %v55
    %v143 = vpop.f32.mrb[0].mxu0
    %v144 = vadd.f32 0.0, %v143
    %v145 = vpop.f32.mrb[0].mxu0
    %146 = vdwg.mxu0
    %v147 = vmul.f32 %v54, %v54
    %v148 = vmul.f32 %v55, %v55
    %149 = vadd.xlane.f32.xlu0 %v147
    %v150 = vpop.xlane.xlu0 %149
    %151 = vadd.xlane.f32.xlu0 %v148
    %v152 = vpop.xlane.xlu0 %151
    %v153 = vrsqrt.pop %v150
    %v154 = vmul.f32 %v150, %v153
    %vm155 = vcmp.eq.f32.partialorder %v150, inf
    %v156 = vsel %vm155, %v150, %v154
    %vm157 = vcmp.eq.f32.partialorder %v150, 0.0
    %v158 = vand.u32 %v150, 2147483648
    %v159 = vsel %vm157, %v158, %v156
    %v160 = vrsqrt.pop %v152
    %v161 = vmul.f32 %v152, %v160
    %vm162 = vcmp.eq.f32.partialorder %v152, inf
    %v163 = vsel %vm162, %v152, %v161
    %vm164 = vcmp.eq.f32.partialorder %v152, 0.0
    %v165 = vand.u32 %v152, 2147483648
    %v166 = vsel %vm164, %v165, %v163
    %v167 = vmax.f32 %v159, 1e-05
    %v168 = vmax.f32 %v166, 1e-05
    %v169 = vmul.f32 %v139, %v139
    %v170 = vmul.f32 %v144, %v144
    %171 = vadd.xlane.f32.xlu0 %v169
    %v172 = vpop.xlane.xlu0 %171
    %173 = vadd.xlane.f32.xlu0 %v170
    %v174 = vpop.xlane.xlu0 %173
    %v175 = vrsqrt.pop %v172
    %v176 = vmul.f32 %v172, %v175
    %vm177 = vcmp.eq.f32.partialorder %v172, inf
    %v178 = vsel %vm177, %v172, %v176
    %vm179 = vcmp.eq.f32.partialorder %v172, 0.0
    %v180 = vand.u32 %v172, 2147483648
    %v181 = vsel %vm179, %v180, %v178
    %v182 = vrsqrt.pop %v174
    %v183 = vmul.f32 %v174, %v182
    %vm184 = vcmp.eq.f32.partialorder %v174, inf
    %v185 = vsel %vm184, %v174, %v183
    %vm186 = vcmp.eq.f32.partialorder %v174, 0.0
    %v187 = vand.u32 %v174, 2147483648
    %v188 = vsel %vm186, %v187, %v185
    %v189 = vrcp.pop %v167
    %v190 = vmul.f32 %v181, %v189
    %v191 = vrcp.pop %v168
    %v192 = vmul.f32 %v188, %v191
    %v193 = vmax.f32 %v167, -0.99999
    %v194 = vmax.f32 %v168, -0.99999
    %v195 = vmin.f32 %v193, 0.99999
    %v196 = vmin.f32 %v194, 0.99999
    %v197 = vadd.f32 %v195, 1.0
    %v198 = vadd.f32 %v196, 1.0
    %v199 = vlog2.pop %v197
    %v200 = vmul.f32 %v199, 0.6931472
    %v201 = vlog2.pop %v198
    %v202 = vmul.f32 %v201, 0.6931472
    %v203 = vsub.f32 1.0, %v195
    %v204 = vsub.f32 1.0, %v196
    %v205 = vlog2.pop %v203
    %v206 = vmul.f32 %v205, 0.6931472
    %v207 = vlog2.pop %v204
    %v208 = vmul.f32 %v207, 0.6931472
    %v209 = vsub.f32 %v200, %v206
    %v210 = vsub.f32 %v202, %v208
    %v211 = vmul.f32 %v209, 0.5
    %v212 = vmul.f32 %v210, 0.5
    %v213 = vmul.f32 %v190, %v211
    %v214 = vmul.f32 %v192, %v212
    %v215 = vmax.f32 %v213, -15.0
    %v216 = vmax.f32 %v214, -15.0
    %v217 = vmin.f32 %v215, 15.0
    %v218 = vmin.f32 %v216, 15.0
    %v219 = vtanh.pop %v217
    %v220 = vtanh.pop %v218
    %v221 = vmax.f32 %v181, 1e-30
    %v222 = vmax.f32 %v188, 1e-30
    %v223 = vrcp.pop %v221
    %v224 = vmul.f32 1.0, %v223
    %v225 = vrcp.pop %v222
    %v226 = vmul.f32 1.0, %v225
    %vm227 = vcmp.eq.f32.partialorder %v181, 0.0
    %vm228 = vcmp.eq.f32.partialorder %v188, 0.0
    %v229 = vmul.f32 %v219, %v224
    %v230 = vmul.f32 %v220, %v226
    %v231 = vsel %vm227, 0.0, %v229
    %v232 = vsel %vm228, 0.0, %v230
    %v233 = vmul.f32 %v139, %v231
    %v234 = vmul.f32 %v144, %v232
    %v235 = vmul.f32 %v231, %v181
    %v236 = vmul.f32 %v232, %v188
    %v237 = vmax.f32 %v235, 1e-05
    %v238 = vmax.f32 %v236, 1e-05
    %vm239 = vcmp.gt.f32.partialorder %v237, 0.999
    %vm240 = vcmp.gt.f32.partialorder %v238, 0.999
    %v241 = vrcp.pop %v237
    %v242 = vmul.f32 0.999, %v241
    %v243 = vrcp.pop %v238
    %v244 = vmul.f32 0.999, %v243
    %v245 = vsel %vm239, %v242, 1.0
    %v246 = vsel %vm240, %v244, 1.0
    %v247 = vmul.f32 %v233, %v245
    %v248 = vmul.f32 %v234, %v246
    %v249 = vmin.f32 %v237, 0.999
    %v250 = vmin.f32 %v238, 0.999
    %v251 = vld [vmem:[#allocation7] sm:$0x1]
    %v252 = vmul.f32 %v249, %v249
    %v253 = vmul.f32 %v250, %v250
    %v254 = vmul.f32 %v251, %v251
    %vm255 = vcmask 1040384
    %v256 = vsel %vm255, %v254, 0.0
    %257 = vadd.xlane.f32.xlu0 %v256
    %v258 = vpop.xlane.xlu0 %257
    %v260 = vlaneseq
    %v261 = vshrl.u32 %v260, 7
    %v262 = vsub.s32 0, %v261
    %v263 = vrot.slane %v251, %v262
    %v265 = vmul.f32 %v247, %v263
    %v266 = vmul.f32 %v248, %v263
    %267 = vadd.xlane.f32.xlu0 %v265
    %v268 = vpop.xlane.xlu0 %267
    %269 = vadd.xlane.f32.xlu0 %v266
    %v270 = vpop.xlane.xlu0 %269
    %v271 = vmul.f32 %v268, 2.0
    %v272 = vmul.f32 %v270, 2.0
    %v273 = vadd.f32 %v271, 1.0
    %v274 = vadd.f32 %v272, 1.0
    %v275 = vlaneseq
    %v276 = vshrl.u32 %v275, 7
    %v277 = vsub.s32 0, %v276
    %v278 = vrot.slane %v258, %v277
    %v279 = vadd.f32 %v273, %v278
    %v280 = vadd.f32 %v274, %v278
    %v281 = vmul.f32 %v279, %v247
    %v282 = vmul.f32 %v280, %v248
    %v283 = vsub.f32 1.0, %v252
    %v284 = vsub.f32 1.0, %v253
    %v285 = vmul.f32 %v283, %v263
    %v286 = vmul.f32 %v284, %v263
    %v287 = vadd.f32 %v281, %v285
    %v288 = vadd.f32 %v282, %v286
    %v289 = vmul.f32 %v252, %v278
    %v290 = vmul.f32 %v253, %v278
    %v291 = vadd.f32 %v273, %v289
    %v292 = vadd.f32 %v274, %v290
    %v293 = vadd.f32 %v291, 1e-05
    %v294 = vadd.f32 %v292, 1e-05
    %v295 = vrcp.pop %v293
    %v296 = vmul.f32 1.0, %v295
    %v297 = vrcp.pop %v294
    %v298 = vmul.f32 1.0, %v297
    %v299 = vmul.f32 %v287, %v296
    %v300 = vmul.f32 %v288, %v298
    %v301 = vmul.f32 %v299, %v299
    %v302 = vmul.f32 %v300, %v300
    %303 = vadd.xlane.f32.xlu0 %v301
    %v304 = vpop.xlane.xlu0 %303
    %305 = vadd.xlane.f32.xlu0 %v302
    %v306 = vpop.xlane.xlu0 %305
    %v307 = vrsqrt.pop %v304
    %v308 = vmul.f32 %v304, %v307
    %vm309 = vcmp.eq.f32.partialorder %v304, inf
    %v310 = vsel %vm309, %v304, %v308
    %vm311 = vcmp.eq.f32.partialorder %v304, 0.0
    %v312 = vand.u32 %v304, 2147483648
    %v313 = vsel %vm311, %v312, %v310
    %v314 = vrsqrt.pop %v306
    %v315 = vmul.f32 %v306, %v314
    %vm316 = vcmp.eq.f32.partialorder %v306, inf
    %v317 = vsel %vm316, %v306, %v315
    %vm318 = vcmp.eq.f32.partialorder %v306, 0.0
    %v319 = vand.u32 %v306, 2147483648
    %v320 = vsel %vm318, %v319, %v317
    %v321 = vmax.f32 %v313, 1e-05
    %v322 = vmax.f32 %v320, 1e-05
    %vm323 = vcmp.gt.f32.partialorder %v321, 0.999
    %vm324 = vcmp.gt.f32.partialorder %v322, 0.999
    %v325 = vrcp.pop %v321
    %v326 = vmul.f32 0.999, %v325
    %v327 = vrcp.pop %v322
    %v328 = vmul.f32 0.999, %v327
    %v329 = vsel %vm323, %v326, 1.0
    %v330 = vsel %vm324, %v328, 1.0
    %v331 = vmul.f32 %v299, %v329
    %v332 = vmul.f32 %v300, %v330
    %333 = vst [vmem:[#allocation8] sm:$0xff] %v331
    %334 = vst [vmem:[#allocation8 + $0x8] sm:$0xff] %v332
    // Predicated region
    $region26: #{tpu_custom_call.1} parent=1 // pred_check
      _
    $region27: #{tpu_custom_call.1} parent=1 // pred_check_branch
      %336 = sbr.rel (0) target = $region29
    $region28: #{tpu_custom_call.1} parent=1 // pred_region
      %s338 = ssub.s32 256, 256
      %339 = vsyncadd [#allocation4], %s338
      %s340 = sshll.u32 [#allocation8], 4
      %s341 = int_to_ptr.vmem [resolvable:$true] %s340
      %346 = dma.vmem_to_hbm [thread:$0]  %s341, 256, %s3, [#allocation4], 128, 128, 8
    $region29: #{tpu_custom_call.1} parent=1 // pred_fallthru
      _
    // Predicated region
    $region30: #{tpu_custom_call.1} parent=1 // pred_check
      _
    $region31: #{tpu_custom_call.1} parent=1 // pred_check_branch
      %348 = sbr.rel (0) target = $region33
    $region32: #{tpu_custom_call.1} parent=1 // pred_region
      %349 = dma.done [#allocation4], 256
    $region33: #{tpu_custom_call.1} parent=1 // pred_fallthru
      _
    %350 = vsyncpa [#allocation3], 1
    %351 = vsyncpa [#allocation6], 1
    %352 = vsyncpa [#allocation4], 1

</llo_original>
